<compile_context>
chip_gen: v6e
topology: v6e:2x2x1
jax: 0.10.0
libtpu: 0.0.40
codegen_flags: <defaults>
</compile_context>

<pallas_src>
import math

import jax
import jax.numpy as jnp
import numpy as np
from jax.experimental import pallas as pl
from jax.experimental.pallas import tpu as pltpu


def _fused_affine_kernel(x_ref, scale_ref, shift_ref, z_ref):
    """One tile of the folded composition: z = x * scale + shift (dtype-native).

    x_ref:     (TB, DB) input tile
    scale_ref: (1,  DB) combined scale (broadcast over rows)
    shift_ref: (1,  DB) combined shift
    z_ref:     (TB, DB) output tile
    """
    z_ref[...] = x_ref[...] * scale_ref[...] + shift_ref[...]


def _round_up(x, m):
    return ((x + m - 1) // m) * m


def _round_down(x, m):
    return (x // m) * m


def _num_tensorcores():
    """Best-effort TensorCore count for grid balancing; 1 if unknown."""
    try:
        info = pltpu.get_tpu_info()
    except Exception:
        return 1
    for attr in ("num_cores", "core_count", "tensorcores_per_chip", "num_tensorcores"):
        v = getattr(info, attr, None)
        if isinstance(v, int) and v > 0:
            return v
    return 1


def bijective_composition_forward(x, log_scale, shift, *, block_bytes=2 << 20):
    """Forward of the composed flow.

    x:         (B, D) input
    log_scale: (L, D) per-layer log-scales
    shift:     (L, D) per-layer shifts
    Returns (z, log_det) with z.shape == x.shape, log_det.shape == (B,).
    """
    B, D = x.shape
    L = log_scale.shape[0]
    assert shift.shape == (L, D)

    # ---- Fold the L elementwise affines into one (wrapper-side, O(L*D)).
    # Sequentially: x*S + T with S = exp(sum_l ls_l),
    #               T = sum_l b_l * exp(sum_{m>l} ls_m)   (suffix sums).
    ls32 = log_scale.astype(jnp.float32)
    sh32 = shift.astype(jnp.float32)
    suffix = jnp.flip(jnp.cumsum(jnp.flip(ls32, 0), 0), 0) - ls32      # (L, D)
    combined_scale = jnp.exp(jnp.sum(ls32, axis=0))                    # (D,)
    combined_shift = jnp.sum(sh32 * jnp.exp(suffix), axis=0)           # (D,)

    # ---- log|det J| is data-independent for elementwise-affine layers.
    # TODO(synk): this shortcut breaks if a non-affine Bijection is composed in.
    log_det = jnp.full((B,), jnp.sum(ls32), dtype=jnp.float32)

    # ---- Lane-dense reshape when D is not a multiple of 128 (free view).
    k = 1
    if D % 128 != 0:
        k_cand = math.lcm(D, 128) // D
        if k_cand > 1 and B % k_cand == 0:
            k = k_cand
    B_eff, D_eff = B // k, D * k
    x_eff = x.reshape(B_eff, D_eff) if k > 1 else x
    scale_eff = jnp.tile(combined_scale, k).reshape(1, D_eff).astype(x.dtype)
    shift_eff = jnp.tile(combined_shift, k).reshape(1, D_eff).astype(x.dtype)

    itemsize = jnp.dtype(x.dtype).itemsize

    # ---- Feature blocking: cap one block's bytes (matters for huge D / v7x VMEM).
    if D_eff % 128 == 0 and 8 * D_eff * itemsize > block_bytes:
        d_blk = max(128, _round_down(block_bytes // (8 * itemsize), 128))
        d_blk = min(d_blk, D_eff)
    else:
        d_blk = D_eff

    # ---- Batch tile from the VMEM byte budget (accounts for D and dtype).
    tb = _round_down(max(block_bytes // (d_blk * itemsize), 8), 8)
    if tb > B_eff:
        # Keep the block inside the array: full-extent for tiny batches,
        # otherwise the largest multiple of 8 that fits (boundary block masks).
        tb = B_eff if B_eff < 8 else max(8, _round_down(B_eff, 8))

    # ---- Multi-TensorCore parts: even, multiple-of-cores step count on the
    # parallel batch axis.  Single-TC parts (v5e/v6e) keep the largest block.
    num_cores = _num_tensorcores()
    if num_cores >= 2 and _round_up(B_eff, 8) // 8 >= 2 * num_cores:
        steps = pl.cdiv(B_eff, tb)
        target = _round_up(max(steps, 2 * num_cores), num_cores)
        tb = max(8, _round_up(pl.cdiv(B_eff, target), 8))

    grid = (pl.cdiv(B_eff, tb), pl.cdiv(D_eff, d_blk))

    # ---- Raise scoped VMEM only if the double-buffered working set needs it
    # (v5e default scope is 16 MiB).
    blk_bytes = tb * d_blk * itemsize
    need = 4 * blk_bytes + 4 * d_blk * itemsize + (2 << 20)
    cp_kwargs = dict(dimension_semantics=("parallel", "parallel"))
    if need > (12 << 20):
        cp_kwargs["vmem_limit_bytes"] = int(min(need, 32 << 20))

    z = pl.pallas_call(
        _fused_affine_kernel,
        out_shape=jax.ShapeDtypeStruct((B_eff, D_eff), x.dtype),
        grid=grid,
        in_specs=[
            pl.BlockSpec((tb, d_blk), lambda i, j: (i, j)),   # x: tiled (B, D)
            pl.BlockSpec((1, d_blk), lambda i, j: (0, j)),    # combined scale
            pl.BlockSpec((1, d_blk), lambda i, j: (0, j)),    # combined shift
        ],
        out_specs=pl.BlockSpec((tb, d_blk), lambda i, j: (i, j)),
        compiler_params=pltpu.CompilerParams(**cp_kwargs),
    )(x_eff, scale_eff, shift_eff)

    if k > 1:
        z = z.reshape(B, D)
    return z, log_det


def _reference_forward(x, log_scale, shift):
    """Pure-JAX reference mirroring BijectiveComposition.forward layer by layer."""
    x = x.astype(jnp.float32)
    log_det = jnp.zeros((x.shape[0],), dtype=jnp.float32)
    for l in range(log_scale.shape[0]):
        x = x * jnp.exp(log_scale[l])[None, :] + shift[l][None, :]
        log_det = log_det + jnp.sum(log_scale[l])
    return x, log_det


if __name__ == "__main__":
    key = jax.random.PRNGKey(0)

    # Small configs: the primary one plus shapes exercising the
    # non-divisible-grid and lane-dense-reshape paths (no pad / slice anywhere).
    configs = [
        (16, 128, 3),   # B, D (event_shape=(D,)), L layers
        (20, 128, 3),   # batch not a multiple of the tile -> masked tail block
        (16, 64, 4),    # D < 128 -> lane-dense reshape (B,64) -> (B/2, 128)
    ]
    for B, D, L in configs:
        kx, kls, ksh, key = jax.random.split(key, 4)
        x = jax.random.normal(kx, (B, D), dtype=jnp.float32)
        log_scale = 0.1 * jax.random.normal(kls, (L, D), dtype=jnp.float32)
        shift = jax.random.normal(ksh, (L, D), dtype=jnp.float32)

        z, log_det = bijective_composition_forward(x, log_scale, shift)
        z = jax.block_until_ready(z)
        log_det = jax.block_until_ready(log_det)

        z_ref, log_det_ref = _reference_forward(x, log_scale, shift)
        assert z.shape == x.shape
        assert log_det.shape == (B,)
        np.testing.assert_allclose(np.asarray(z), np.asarray(z_ref),
                                   rtol=1e-5, atol=1e-5)
        np.testing.assert_allclose(np.asarray(log_det), np.asarray(log_det_ref),
                                   rtol=1e-5, atol=1e-5)

    print("KERNEL_OK")
</pallas_src>

<mosaic_0001>
module attributes {stable_mosaic.version = 11 : i64} {
  func.func @_fused_affine_kernel(%arg0: i32, %arg1: i32, %arg2: memref<16x128xf32, #tpu.memory_space<vmem>>, %arg3: memref<1x128xf32, #tpu.memory_space<vmem>>, %arg4: memref<1x128xf32, #tpu.memory_space<vmem>>, %arg5: memref<16x128xf32, #tpu.memory_space<vmem>>) attributes {dimension_semantics = [#tpu.dimension_semantics<parallel>, #tpu.dimension_semantics<parallel>], iteration_bounds = array<i64: 1, 1>, scalar_prefetch = 0 : i64, scratch_operands = 0 : i64, tpu.core_type = #tpu.core_type<tc>, window_params = [{transform_indices = @transform_0, window_bounds = array<i64: 16, 128>}, {transform_indices = @transform_1, window_bounds = array<i64: 1, 128>}, {transform_indices = @transform_2, window_bounds = array<i64: 1, 128>}, {transform_indices = @transform_3, window_bounds = array<i64: 16, 128>}]} {
    %c0 = arith.constant 0 : index
    %c0_0 = arith.constant 0 : index
    %0 = vector.load %arg2[%c0, %c0_0] : memref<16x128xf32, #tpu.memory_space<vmem>>, vector<16x128xf32>
    %c0_1 = arith.constant 0 : index
    %c0_2 = arith.constant 0 : index
    %1 = vector.load %arg3[%c0_1, %c0_2] : memref<1x128xf32, #tpu.memory_space<vmem>>, vector<1x128xf32>
    %2 = vector.broadcast %1 : vector<1x128xf32> to vector<16x128xf32>
    %3 = arith.mulf %0, %2 : vector<16x128xf32>
    %c0_3 = arith.constant 0 : index
    %c0_4 = arith.constant 0 : index
    %4 = vector.load %arg4[%c0_3, %c0_4] : memref<1x128xf32, #tpu.memory_space<vmem>>, vector<1x128xf32>
    %5 = vector.broadcast %4 : vector<1x128xf32> to vector<16x128xf32>
    %6 = arith.addf %3, %5 : vector<16x128xf32>
    %c0_5 = arith.constant 0 : index
    %c0_6 = arith.constant 0 : index
    %7 = vector.load %arg5[%c0_5, %c0_6] : memref<16x128xf32, #tpu.memory_space<vmem>>, vector<16x128xf32>
    tpu.vector_store %arg5[%c0_5, %c0_6], %6 {strides = array<i32>} : memref<16x128xf32, #tpu.memory_space<vmem>>, vector<16x128xf32>,
    return
  }
  func.func @transform_0(%arg0: i32, %arg1: i32) -> (i32, i32) {
    %c0_i32 = arith.constant 0 : i32
    return %arg0, %arg1 : i32, i32
  }
  func.func @transform_1(%arg0: i32, %arg1: i32) -> (i32, i32) {
    %c0_i32 = arith.constant 0 : i32
    %c0_i32_0 = arith.constant 0 : i32
    return %c0_i32, %arg1 : i32, i32
  }
  func.func @transform_2(%arg0: i32, %arg1: i32) -> (i32, i32) {
    %c0_i32 = arith.constant 0 : i32
    %c0_i32_0 = arith.constant 0 : i32
    return %c0_i32, %arg1 : i32, i32
  }
  func.func @transform_3(%arg0: i32, %arg1: i32) -> (i32, i32) {
    %c0_i32 = arith.constant 0 : i32
    return %arg0, %arg1 : i32, i32
  }
}

</mosaic_0001>

<llo_original>
// kernel: tpu_custom_call.1
$region0: #{tpu_custom_call.1}
  #allocation0 [shape = 'u32[]', space=smem, size = 0x4, offset = 0x4, fixed_abs, tag = 'smem constant byte address 0x4 - core index']
  #allocation1 [shape = 'u32[144,128]{1,0:T(1,128)}', space=vmem, size = 0x12000, scoped, tag = 'internal scratch']
  %s0 = inlined_call_operand.hbm [shape: f32[16,128], index: 0, kind: input, shape index: {}]
  %s1 = inlined_call_operand.vmem [shape: f32[1,128], index: 1, kind: input, shape index: {}]
  %s2 = inlined_call_operand.vmem [shape: f32[1,128], index: 2, kind: input, shape index: {}]
  %s3 = inlined_call_operand.hbm [shape: f32[16,128], index: 3, kind: output, shape index: {}]
  %s4 = sld [smem:[#allocation0]]
  $region26: #{tpu_custom_call.1} parent=0
    _
  %s6 = ssub.s32 1, %s4
  %s7 = scalar_select 0, %s6, %s4
  $region1: #{tpu_custom_call.1} parent=0
    #allocation2 [shape = 'u8[8192]{0}', space=vmem, size = 0x2000, scoped, tag = 'input window, operand 0, single buffered']
    #allocation3 [shape = 's32[1]{0}', space=sflag, size = 0x4, scoped, tag = 'scoped memory for tpu_custom_call.1']
    #allocation4 [shape = 's32[1]{0}', space=sflag, size = 0x4, scoped, tag = 'scoped memory for tpu_custom_call.1']
    #allocation5 [shape = 'u8[8192]{0}', space=vmem, size = 0x2000, scoped, tag = 'output window, operand 0, single buffered']
    %8 = vsyncpa [#allocation3], 0
    %9 = vsyncpa [#allocation4], 0
    // Predicated region
    $region2: #{tpu_custom_call.1} parent=1 // pred_check
      _
    $region3: #{tpu_custom_call.1} parent=1 // pred_check_branch
      %11 = sbr.rel (0) target = $region5
    $region4: #{tpu_custom_call.1} parent=1 // pred_region
      %s13 = ssub.s32 256, 256
      %14 = vsyncadd [#allocation3], %s13
      %s15 = sshll.u32 [#allocation2], 4
      %s16 = int_to_ptr.vmem [resolvable:$true] %s15
      %21 = dma.hbm_to_vmem [thread:$0]  %s0, 256, %s16, [#allocation3], 128, 128, 8
    $region5: #{tpu_custom_call.1} parent=1 // pred_fallthru
      _
    // Predicated region
    $region6: #{tpu_custom_call.1} parent=1 // pred_check
      _
    $region7: #{tpu_custom_call.1} parent=1 // pred_check_branch
      %23 = sbr.rel (0) target = $region9
    $region8: #{tpu_custom_call.1} parent=1 // pred_region
      _
    $region9: #{tpu_custom_call.1} parent=1 // pred_fallthru
      _
    // Predicated region
    $region10: #{tpu_custom_call.1} parent=1 // pred_check
      _
    $region11: #{tpu_custom_call.1} parent=1 // pred_check_branch
      %25 = sbr.rel (0) target = $region13
    $region12: #{tpu_custom_call.1} parent=1 // pred_region
      _
    $region13: #{tpu_custom_call.1} parent=1 // pred_fallthru
      _
    // Predicated region
    $region14: #{tpu_custom_call.1} parent=1 // pred_check
      _
    $region15: #{tpu_custom_call.1} parent=1 // pred_check_branch
      %27 = sbr.rel (0) target = $region17
    $region16: #{tpu_custom_call.1} parent=1 // pred_region
      %28 = dma.done [#allocation3], 256
    $region17: #{tpu_custom_call.1} parent=1 // pred_fallthru
      _
    %v29 = vld [vmem:[#allocation2] sm:$0xff]
    %v30 = vld [vmem:[#allocation2 + $0x8] sm:$0xff]
    %v31 = vld [vmem:[%s1] sm:$0x1]
    %v33 = vlaneseq
    %v34 = vshrl.u32 %v33, 7
    %v35 = vsub.s32 0, %v34
    %v36 = vrot.slane %v31, %v35
    %v38 = vmul.f32 %v29, %v36
    %v39 = vmul.f32 %v30, %v36
    %v40 = vld [vmem:[%s2] sm:$0x1]
    %v42 = vlaneseq
    %v43 = vshrl.u32 %v42, 7
    %v44 = vsub.s32 0, %v43
    %v45 = vrot.slane %v40, %v44
    %v47 = vadd.f32 %v38, %v45
    %v48 = vadd.f32 %v39, %v45
    %49 = vst [vmem:[#allocation5] sm:$0xff] %v47
    %50 = vst [vmem:[#allocation5 + $0x8] sm:$0xff] %v48
    // Predicated region
    $region18: #{tpu_custom_call.1} parent=1 // pred_check
      _
    $region19: #{tpu_custom_call.1} parent=1 // pred_check_branch
      %52 = sbr.rel (0) target = $region21
    $region20: #{tpu_custom_call.1} parent=1 // pred_region
      %s54 = ssub.s32 256, 256
      %55 = vsyncadd [#allocation4], %s54
      %s56 = sshll.u32 [#allocation5], 4
      %s57 = int_to_ptr.vmem [resolvable:$true] %s56
      %62 = dma.vmem_to_hbm [thread:$0]  %s57, 256, %s3, [#allocation4], 128, 128, 8
    $region21: #{tpu_custom_call.1} parent=1 // pred_fallthru
      _
    // Predicated region
    $region22: #{tpu_custom_call.1} parent=1 // pred_check
      _
    $region23: #{tpu_custom_call.1} parent=1 // pred_check_branch
      %64 = sbr.rel (0) target = $region25
    $region24: #{tpu_custom_call.1} parent=1 // pred_region
      %65 = dma.done [#allocation4], 256
    $region25: #{tpu_custom_call.1} parent=1 // pred_fallthru
      _
    %66 = vsyncpa [#allocation3], 1
    %67 = vsyncpa [#allocation4], 1

</llo_original>
